<compile_context>
chip_gen: v5e
topology: v5e:2x2
jax: 0.10.0
libtpu: 0.0.40
codegen_flags: <defaults>
</compile_context>

<pallas_src>
import functools
import math

import jax
import jax.numpy as jnp
from jax.experimental import pallas as pl
from jax.experimental.pallas import tpu as pltpu


def _round_up(a, m):
    return (a + m - 1) // m * m


def _vmem_capacity_bytes():
    try:
        return int(pltpu.get_tpu_info().vmem_capacity_bytes)
    except Exception:
        return 64 * 1024 * 1024  # conservative fallback: v7x per-TensorCore VMEM


def _mlp_layernorm(x, m, w1_ref, b1_ref, w2_ref, b2_ref, w3_ref, b3_ref,
                   g_ref, be_ref, *, in_dim, eps=1e-5):
    """Shared fused MLP + LayerNorm on one row tile (all math in f32)."""
    w1 = w1_ref[...]
    # Split-K form of concat([x, m]) @ W1: identical math, no VMEM lane-concat.
    h = (jnp.dot(x, w1[:in_dim, :], preferred_element_type=jnp.float32)
         + jnp.dot(m, w1[in_dim:, :], preferred_element_type=jnp.float32)
         + b1_ref[...])
    h = jnp.tanh(h)
    h = jnp.tanh(jnp.dot(h, w2_ref[...], preferred_element_type=jnp.float32)
                 + b2_ref[...])
    y = jnp.dot(h, w3_ref[...], preferred_element_type=jnp.float32) + b3_ref[...]
    mu = jnp.mean(y, axis=-1, keepdims=True)
    c = y - mu
    var = jnp.mean(c * c, axis=-1, keepdims=True)
    return c * jax.lax.rsqrt(var + eps) * g_ref[...] + be_ref[...]


def _node_mlp_kernel_plain(x_ref, m_ref, w1_ref, b1_ref, w2_ref, b2_ref, w3_ref,
                           b3_ref, g_ref, be_ref, o_ref, *, in_dim):
    out = _mlp_layernorm(x_ref[...], m_ref[...], w1_ref, b1_ref, w2_ref, b2_ref,
                         w3_ref, b3_ref, g_ref, be_ref, in_dim=in_dim)
    o_ref[...] = out.astype(o_ref.dtype)


def _node_mlp_kernel_lane_dense(x_ref, m_ref, w1_ref, b1_ref, w2_ref, b2_ref,
                                w3_ref, b3_ref, g_ref, be_ref, o_ref, *,
                                rows, in_dim):
    # Un-flatten lane-dense [rows*in_dim/128, 128] input slabs to [rows, in_dim].
    x = x_ref[...].reshape(rows, in_dim)
    m = m_ref[...].reshape(rows, in_dim)
    out = _mlp_layernorm(x, m, w1_ref, b1_ref, w2_ref, b2_ref, w3_ref, b3_ref,
                         g_ref, be_ref, in_dim=in_dim)
    # Re-flatten to the lane-dense output slab -> unmasked 128-lane stores.
    o_ref[...] = out.reshape(o_ref.shape).astype(o_ref.dtype)


@functools.partial(jax.jit, static_argnames=("tile_rows", "lane_dense"))
def node_model_forward(x, msgs, params, tile_rows=None, lane_dense=True):
    """x, msgs: [N, input_dim] float32.  Returns [N, embed_dim] float32."""
    w1, b1, w2, b2, w3, b3, gamma, beta = params
    n, in_dim = x.shape
    hid = w1.shape[1]
    emb = w3.shape[1]

    # Lane-dense layouts only apply when in_dim / emb tile the 128-lane vreg.
    lane_dense = bool(lane_dense) and (128 % in_dim == 0) and (128 % emb == 0)
    g_in = 128 // in_dim if lane_dense else 1   # x/msgs rows packed per slab row
    g_out = 128 // emb if lane_dense else 1     # output rows packed per slab row

    # ---- tile sizing: fill VMEM; >=4 steps only when steps stay large --------
    vmem_cap = _vmem_capacity_bytes()           # 64 MiB (v7x/TC) .. 128 MiB (v5e/v6e)
    budget = min(vmem_cap // 2, 32 * 1024 * 1024)
    # Conservative f32 VMEM bytes/row: double-buffered I/O blocks + lane-padded
    # [row, hid]/[row, emb] intermediates.  The plain layout pads its input and
    # output blocks to 128 lanes in VMEM, hence the larger estimate.
    per_row = 4096 if lane_dense else 6144
    row_mult = 8 * math.lcm(g_in, g_out)        # keeps block sublane dims % 8 == 0
    tile = max(row_mult, budget // per_row // row_mult * row_mult)
    if tile_rows is not None:
        tile = max(row_mult, min(tile, _round_up(tile_rows, row_mult)))
    if n > 4 * 2048:
        # >=4 grid steps: 2 per TensorCore on v7x for DMA/compute overlap and
        # pipeline depth on 1-TC v5e/v6e -- but never below ~2048 rows/step.
        tile = min(tile, _round_up(-(-n // 4), row_mult))

    # ---- HBM views (free, row-major-preserving reshapes) ----------------------
    if lane_dense:
        n_rows = _round_up(n, math.lcm(g_in, g_out))
        if n_rows != n:
            # Rare remainder path: this jnp.pad rewrites x/msgs through HBM once.
            # Supply N as a multiple of 128//in_dim to avoid it entirely.
            pad = n_rows - n
            x = jnp.pad(x, ((0, pad), (0, 0)))
            msgs = jnp.pad(msgs, ((0, pad), (0, 0)))
        x_in = x.reshape(n_rows // g_in, g_in * in_dim)
        m_in = msgs.reshape(n_rows // g_in, g_in * in_dim)
    else:
        n_rows = n
        x_in, m_in = x, msgs

    tile = min(tile, _round_up(n_rows, row_mult))
    if tile >= n_rows:
        tile = n_rows                      # single step: exact (full-dim) blocks
    grid = (pl.cdiv(n_rows, tile),)        # partial last block is masked by Pallas

    # Biases / affine params as [1, F] rows (broadcast in-kernel, VMEM-resident).
    b1r = b1.reshape(1, hid)
    b2r = b2.reshape(1, hid)
    b3r = b3.reshape(1, emb)
    gr = gamma.reshape(1, emb)
    br = beta.reshape(1, emb)

    resident = lambda shape: pl.BlockSpec(shape, lambda i: (0, 0))
    weight_specs = [
        resident((2 * in_dim, hid)), resident((1, hid)),   # W1, b1
        resident((hid, hid)), resident((1, hid)),          # W2, b2
        resident((hid, emb)), resident((1, emb)),          # W3, b3
        resident((1, emb)), resident((1, emb)),            # gamma, beta
    ]

    if lane_dense:
        kernel = functools.partial(_node_mlp_kernel_lane_dense,
                                   rows=tile, in_dim=in_dim)
        io_block_in = (tile // g_in, g_in * in_dim)   # e.g. (tile/8, 128)
        io_block_out = (tile // g_out, g_out * emb)   # e.g. (tile/4, 128)
        out_shape = jax.ShapeDtypeStruct((n_rows // g_out, g_out * emb), jnp.float32)
    else:
        kernel = functools.partial(_node_mlp_kernel_plain, in_dim=in_dim)
        io_block_in = (tile, in_dim)
        io_block_out = (tile, emb)
        out_shape = jax.ShapeDtypeStruct((n_rows, emb), jnp.float32)

    in_specs = [pl.BlockSpec(io_block_in, lambda i: (i, 0)),
                pl.BlockSpec(io_block_in, lambda i: (i, 0))] + weight_specs
    out_specs = pl.BlockSpec(io_block_out, lambda i: (i, 0))

    cost = pl.CostEstimate(
        flops=2 * n * (2 * in_dim * hid + hid * hid + hid * emb),
        transcendentals=2 * n * hid,                       # two tanh layers
        bytes_accessed=4 * (n * (2 * in_dim + emb)
                            + 2 * in_dim * hid + hid * hid + hid * emb),
    )

    out = pl.pallas_call(
        kernel,
        out_shape=out_shape,
        grid_spec=pltpu.PrefetchScalarGridSpec(
            num_scalar_prefetch=0,
            grid=grid,
            in_specs=in_specs,
            out_specs=out_specs,
        ),
        compiler_params=pltpu.CompilerParams(
            dimension_semantics=("parallel",),
            vmem_limit_bytes=int(min(vmem_cap * 3 // 4, 96 * 1024 * 1024)),
        ),
        cost_estimate=cost,
    )(x_in, m_in, w1, b1r, w2, b2r, w3, b3r, gr, br)

    if lane_dense:
        out = out.reshape(n_rows, emb)     # free, row-major-preserving
    return out[:n] if n_rows != n else out


def run_forward(x, msgs, params, **kw):
    """Prefer the lane-dense layout; fall back to the plain layout if this
    Mosaic version rejects the in-kernel relayout reshapes."""
    try:
        return jax.block_until_ready(
            node_model_forward(x, msgs, params, lane_dense=True, **kw))
    except Exception:
        return jax.block_until_ready(
            node_model_forward(x, msgs, params, lane_dense=False, **kw))


def init_params(key, input_dim, hidden_dim, embed_dim):
    """Deterministic init mirroring the module: xavier_normal_ weights,
    PyTorch-default uniform biases, LayerNorm gamma=1 / beta=0."""
    ks = jax.random.split(key, 6)

    def xavier_normal(k, fan_in, fan_out):
        std = jnp.sqrt(2.0 / (fan_in + fan_out))
        # Stored already transposed as [in, out] for the kernel.
        return std * jax.random.normal(k, (fan_in, fan_out), jnp.float32)

    def bias(k, fan_in, fan_out):
        bound = 1.0 / jnp.sqrt(fan_in)
        return jax.random.uniform(k, (fan_out,), jnp.float32, -bound, bound)

    in2 = input_dim * 2
    w1 = xavier_normal(ks[0], in2, hidden_dim)
    b1 = bias(ks[1], in2, hidden_dim)
    w2 = xavier_normal(ks[2], hidden_dim, hidden_dim)
    b2 = bias(ks[3], hidden_dim, hidden_dim)
    w3 = xavier_normal(ks[4], hidden_dim, embed_dim)
    b3 = bias(ks[5], hidden_dim, embed_dim)
    gamma = jnp.ones((embed_dim,), jnp.float32)
    beta = jnp.zeros((embed_dim,), jnp.float32)
    return (w1, b1, w2, b2, w3, b3, gamma, beta)


def reference_forward(x, msgs, params):
    w1, b1, w2, b2, w3, b3, gamma, beta = params
    h = jnp.concatenate([x, msgs], axis=1)
    h = jnp.tanh(h @ w1 + b1)
    h = jnp.tanh(h @ w2 + b2)
    y = h @ w3 + b3
    mean = jnp.mean(y, axis=-1, keepdims=True)
    var = jnp.mean((y - mean) ** 2, axis=-1, keepdims=True)
    return (y - mean) / jnp.sqrt(var + 1e-5) * gamma + beta


if __name__ == "__main__":
    key = jax.random.PRNGKey(0)
    k_param, k_x, k_m = jax.random.split(key, 3)

    N, INPUT_DIM, HIDDEN_DIM, EMBED_DIM = 16, 16, 32, 32
    params = init_params(k_param, INPUT_DIM, HIDDEN_DIM, EMBED_DIM)

    x = jax.random.normal(k_x, (N, INPUT_DIM), jnp.float32)
    msgs = jax.random.normal(k_m, (N, INPUT_DIM), jnp.float32)
    ref = reference_forward(x, msgs, params)

    # Primary (lane-dense) path, f32 parity with the PyTorch module semantics.
    out = run_forward(x, msgs, params)
    assert out.shape == (N, EMBED_DIM)
    assert jnp.allclose(out, ref, atol=2e-5, rtol=2e-5), "mismatch vs reference"

    # Plain-layout path must also match (it is the guaranteed-lowering fallback).
    out_plain = jax.block_until_ready(
        node_model_forward(x, msgs, params, lane_dense=False))
    assert jnp.allclose(out_plain, ref, atol=2e-5, rtol=2e-5), "plain-layout mismatch"

    # Ragged N (remainder handled by Pallas block masking / minimal pad).
    N2 = 20
    x2 = jax.random.normal(jax.random.PRNGKey(3), (N2, INPUT_DIM), jnp.float32)
    m2 = jax.random.normal(jax.random.PRNGKey(4), (N2, INPUT_DIM), jnp.float32)
    out2 = run_forward(x2, m2, params)
    ref2 = reference_forward(x2, m2, params)
    assert out2.shape == (N2, EMBED_DIM)
    assert jnp.allclose(out2, ref2, atol=2e-5, rtol=2e-5), "ragged-N mismatch"

    # Multi-step grid with a masked partial last block (no wrapper pad of x/msgs).
    N3 = 1000
    x3 = jax.random.normal(jax.random.PRNGKey(5), (N3, INPUT_DIM), jnp.float32)
    m3 = jax.random.normal(jax.random.PRNGKey(6), (N3, INPUT_DIM), jnp.float32)
    out3 = run_forward(x3, m3, params, tile_rows=256)
    ref3 = reference_forward(x3, m3, params)
    assert out3.shape == (N3, EMBED_DIM)
    assert jnp.allclose(out3, ref3, atol=2e-5, rtol=2e-5), "multi-step grid mismatch"

    print("KERNEL_OK")
</pallas_src>

<mosaic_0001>
module attributes {stable_mosaic.version = 11 : i64} {
  func.func @_node_mlp_kernel_lane_dense(%arg0: i32, %arg1: memref<2x128xf32, #tpu.memory_space<vmem>>, %arg2: memref<2x128xf32, #tpu.memory_space<vmem>>, %arg3: memref<32x32xf32, #tpu.memory_space<vmem>>, %arg4: memref<1x32xf32, #tpu.memory_space<vmem>>, %arg5: memref<32x32xf32, #tpu.memory_space<vmem>>, %arg6: memref<1x32xf32, #tpu.memory_space<vmem>>, %arg7: memref<32x32xf32, #tpu.memory_space<vmem>>, %arg8: memref<1x32xf32, #tpu.memory_space<vmem>>, %arg9: memref<1x32xf32, #tpu.memory_space<vmem>>, %arg10: memref<1x32xf32, #tpu.memory_space<vmem>>, %arg11: memref<4x128xf32, #tpu.memory_space<vmem>>) attributes {dimension_semantics = [#tpu.dimension_semantics<parallel>], iteration_bounds = array<i64: 1>, scalar_prefetch = 0 : i64, scratch_operands = 0 : i64, tpu.core_type = #tpu.core_type<tc>, window_params = [{transform_indices = @transform_0, window_bounds = array<i64: 2, 128>}, {transform_indices = @transform_1, window_bounds = array<i64: 2, 128>}, {pipeline_mode = #tpu.pipeline_mode<synchronous>, transform_indices = @transform_2, window_bounds = array<i64: 32, 32>}, {pipeline_mode = #tpu.pipeline_mode<synchronous>, transform_indices = @transform_3, window_bounds = array<i64: 1, 32>}, {pipeline_mode = #tpu.pipeline_mode<synchronous>, transform_indices = @transform_4, window_bounds = array<i64: 32, 32>}, {pipeline_mode = #tpu.pipeline_mode<synchronous>, transform_indices = @transform_5, window_bounds = array<i64: 1, 32>}, {pipeline_mode = #tpu.pipeline_mode<synchronous>, transform_indices = @transform_6, window_bounds = array<i64: 32, 32>}, {pipeline_mode = #tpu.pipeline_mode<synchronous>, transform_indices = @transform_7, window_bounds = array<i64: 1, 32>}, {pipeline_mode = #tpu.pipeline_mode<synchronous>, transform_indices = @transform_8, window_bounds = array<i64: 1, 32>}, {pipeline_mode = #tpu.pipeline_mode<synchronous>, transform_indices = @transform_9, window_bounds = array<i64: 1, 32>}, {transform_indices = @transform_10, window_bounds = array<i64: 4, 128>}]} {
    %c0 = arith.constant 0 : index
    %c0_0 = arith.constant 0 : index
    %0 = vector.load %arg1[%c0, %c0_0] : memref<2x128xf32, #tpu.memory_space<vmem>>, vector<2x128xf32>
    %1 = vector.shape_cast %0 : vector<2x128xf32> to vector<16x16xf32>
    %c0_1 = arith.constant 0 : index
    %c0_2 = arith.constant 0 : index
    %2 = vector.load %arg2[%c0_1, %c0_2] : memref<2x128xf32, #tpu.memory_space<vmem>>, vector<2x128xf32>
    %3 = vector.shape_cast %2 : vector<2x128xf32> to vector<16x16xf32>
    %c0_3 = arith.constant 0 : index
    %c0_4 = arith.constant 0 : index
    %4 = vector.load %arg3[%c0_3, %c0_4] : memref<32x32xf32, #tpu.memory_space<vmem>>, vector<32x32xf32>
    %5 = vector.extract_strided_slice %4 {offsets = [0, 0], sizes = [16, 32], strides = [1, 1]} : vector<32x32xf32> to vector<16x32xf32>
    %cst = arith.constant dense<0.000000e+00> : vector<16x32xf32>
    %6 = tpu.matmul %1, %5, %cst {dimension_numbers = #tpu.dot_dimension_numbers<[1], [0], [0], [1], [0, 0, 1, 1], [], []>} : vector<16x16xf32>, vector<16x32xf32>, vector<16x32xf32> -> vector<16x32xf32>
    %7 = vector.extract_strided_slice %4 {offsets = [16, 0], sizes = [16, 32], strides = [1, 1]} : vector<32x32xf32> to vector<16x32xf32>
    %cst_5 = arith.constant dense<0.000000e+00> : vector<16x32xf32>
    %8 = tpu.matmul %3, %7, %cst_5 {dimension_numbers = #tpu.dot_dimension_numbers<[1], [0], [0], [1], [0, 0, 1, 1], [], []>} : vector<16x16xf32>, vector<16x32xf32>, vector<16x32xf32> -> vector<16x32xf32>
    %9 = arith.addf %6, %8 : vector<16x32xf32>
    %c0_6 = arith.constant 0 : index
    %c0_7 = arith.constant 0 : index
    %10 = vector.load %arg4[%c0_6, %c0_7] : memref<1x32xf32, #tpu.memory_space<vmem>>, vector<1x32xf32>
    %11 = vector.broadcast %10 : vector<1x32xf32> to vector<16x32xf32>
    %12 = arith.addf %9, %11 : vector<16x32xf32>
    %13 = math.tanh %12 : vector<16x32xf32>
    %c0_8 = arith.constant 0 : index
    %c0_9 = arith.constant 0 : index
    %14 = vector.load %arg5[%c0_8, %c0_9] : memref<32x32xf32, #tpu.memory_space<vmem>>, vector<32x32xf32>
    %cst_10 = arith.constant dense<0.000000e+00> : vector<16x32xf32>
    %15 = tpu.matmul %13, %14, %cst_10 {dimension_numbers = #tpu.dot_dimension_numbers<[1], [0], [0], [1], [0, 0, 1, 1], [], []>} : vector<16x32xf32>, vector<32x32xf32>, vector<16x32xf32> -> vector<16x32xf32>
    %c0_11 = arith.constant 0 : index
    %c0_12 = arith.constant 0 : index
    %16 = vector.load %arg6[%c0_11, %c0_12] : memref<1x32xf32, #tpu.memory_space<vmem>>, vector<1x32xf32>
    %17 = vector.broadcast %16 : vector<1x32xf32> to vector<16x32xf32>
    %18 = arith.addf %15, %17 : vector<16x32xf32>
    %19 = math.tanh %18 : vector<16x32xf32>
    %c0_13 = arith.constant 0 : index
    %c0_14 = arith.constant 0 : index
    %20 = vector.load %arg7[%c0_13, %c0_14] : memref<32x32xf32, #tpu.memory_space<vmem>>, vector<32x32xf32>
    %cst_15 = arith.constant dense<0.000000e+00> : vector<16x32xf32>
    %21 = tpu.matmul %19, %20, %cst_15 {dimension_numbers = #tpu.dot_dimension_numbers<[1], [0], [0], [1], [0, 0, 1, 1], [], []>} : vector<16x32xf32>, vector<32x32xf32>, vector<16x32xf32> -> vector<16x32xf32>
    %c0_16 = arith.constant 0 : index
    %c0_17 = arith.constant 0 : index
    %22 = vector.load %arg8[%c0_16, %c0_17] : memref<1x32xf32, #tpu.memory_space<vmem>>, vector<1x32xf32>
    %23 = vector.broadcast %22 : vector<1x32xf32> to vector<16x32xf32>
    %24 = arith.addf %21, %23 : vector<16x32xf32>
    %cst_18 = arith.constant dense<0.000000e+00> : vector<16xf32>
    %25 = vector.multi_reduction <add>, %24, %cst_18 [1] : vector<16x32xf32> to vector<16xf32>
    %26 = vector.shape_cast %25 : vector<16xf32> to vector<16x1xf32>
    %cst_19 = arith.constant 3.200000e+01 : f32
    %27 = vector.broadcast %cst_19 : f32 to vector<16x1xf32>
    %28 = arith.divf %26, %27 : vector<16x1xf32>
    %29 = vector.broadcast %28 : vector<16x1xf32> to vector<16x32xf32>
    %30 = arith.subf %24, %29 : vector<16x32xf32>
    %31 = arith.mulf %30, %30 : vector<16x32xf32>
    %cst_20 = arith.constant dense<0.000000e+00> : vector<16xf32>
    %32 = vector.multi_reduction <add>, %31, %cst_20 [1] : vector<16x32xf32> to vector<16xf32>
    %33 = vector.shape_cast %32 : vector<16xf32> to vector<16x1xf32>
    %cst_21 = arith.constant 3.200000e+01 : f32
    %34 = vector.broadcast %cst_21 : f32 to vector<16x1xf32>
    %35 = arith.divf %33, %34 : vector<16x1xf32>
    %cst_22 = arith.constant 9.99999974E-6 : f32
    %36 = vector.broadcast %cst_22 : f32 to vector<16x1xf32>
    %37 = arith.addf %35, %36 : vector<16x1xf32>
    %38 = math.rsqrt %37 : vector<16x1xf32>
    %39 = vector.broadcast %38 : vector<16x1xf32> to vector<16x32xf32>
    %40 = arith.mulf %30, %39 : vector<16x32xf32>
    %c0_23 = arith.constant 0 : index
    %c0_24 = arith.constant 0 : index
    %41 = vector.load %arg9[%c0_23, %c0_24] : memref<1x32xf32, #tpu.memory_space<vmem>>, vector<1x32xf32>
    %42 = vector.broadcast %41 : vector<1x32xf32> to vector<16x32xf32>
    %43 = arith.mulf %40, %42 : vector<16x32xf32>
    %c0_25 = arith.constant 0 : index
    %c0_26 = arith.constant 0 : index
    %44 = vector.load %arg10[%c0_25, %c0_26] : memref<1x32xf32, #tpu.memory_space<vmem>>, vector<1x32xf32>
    %45 = vector.broadcast %44 : vector<1x32xf32> to vector<16x32xf32>
    %46 = arith.addf %43, %45 : vector<16x32xf32>
    %47 = vector.shape_cast %46 : vector<16x32xf32> to vector<4x128xf32>
    %c0_27 = arith.constant 0 : index
    %c0_28 = arith.constant 0 : index
    %48 = vector.load %arg11[%c0_27, %c0_28] : memref<4x128xf32, #tpu.memory_space<vmem>>, vector<4x128xf32>
    tpu.vector_store %arg11[%c0_27, %c0_28], %47 {strides = array<i32>} : memref<4x128xf32, #tpu.memory_space<vmem>>, vector<4x128xf32>,
    return
  }
  func.func @transform_0(%arg0: i32) -> (i32, i32) {
    %c0_i32 = arith.constant 0 : i32
    %c0_i32_0 = arith.constant 0 : i32
    return %arg0, %c0_i32 : i32, i32
  }
  func.func @transform_1(%arg0: i32) -> (i32, i32) {
    %c0_i32 = arith.constant 0 : i32
    %c0_i32_0 = arith.constant 0 : i32
    return %arg0, %c0_i32 : i32, i32
  }
  func.func @transform_2(%arg0: i32) -> (i32, i32) {
    %c0_i32 = arith.constant 0 : i32
    %c0_i32_0 = arith.constant 0 : i32
    %c0_i32_1 = arith.constant 0 : i32
    return %c0_i32, %c0_i32_0 : i32, i32
  }
  func.func @transform_3(%arg0: i32) -> (i32, i32) {
    %c0_i32 = arith.constant 0 : i32
    %c0_i32_0 = arith.constant 0 : i32
    %c0_i32_1 = arith.constant 0 : i32
    return %c0_i32, %c0_i32_0 : i32, i32
  }
  func.func @transform_4(%arg0: i32) -> (i32, i32) {
    %c0_i32 = arith.constant 0 : i32
    %c0_i32_0 = arith.constant 0 : i32
    %c0_i32_1 = arith.constant 0 : i32
    return %c0_i32, %c0_i32_0 : i32, i32
  }
  func.func @transform_5(%arg0: i32) -> (i32, i32) {
    %c0_i32 = arith.constant 0 : i32
    %c0_i32_0 = arith.constant 0 : i32
    %c0_i32_1 = arith.constant 0 : i32
    return %c0_i32, %c0_i32_0 : i32, i32
  }
  func.func @transform_6(%arg0: i32) -> (i32, i32) {
    %c0_i32 = arith.constant 0 : i32
    %c0_i32_0 = arith.constant 0 : i32
    %c0_i32_1 = arith.constant 0 : i32
    return %c0_i32, %c0_i32_0 : i32, i32
  }
  func.func @transform_7(%arg0: i32) -> (i32, i32) {
    %c0_i32 = arith.constant 0 : i32
    %c0_i32_0 = arith.constant 0 : i32
    %c0_i32_1 = arith.constant 0 : i32
    return %c0_i32, %c0_i32_0 : i32, i32
  }
  func.func @transform_8(%arg0: i32) -> (i32, i32) {
    %c0_i32 = arith.constant 0 : i32
    %c0_i32_0 = arith.constant 0 : i32
    %c0_i32_1 = arith.constant 0 : i32
    return %c0_i32, %c0_i32_0 : i32, i32
  }
  func.func @transform_9(%arg0: i32) -> (i32, i32) {
    %c0_i32 = arith.constant 0 : i32
    %c0_i32_0 = arith.constant 0 : i32
    %c0_i32_1 = arith.constant 0 : i32
    return %c0_i32, %c0_i32_0 : i32, i32
  }
  func.func @transform_10(%arg0: i32) -> (i32, i32) {
    %c0_i32 = arith.constant 0 : i32
    %c0_i32_0 = arith.constant 0 : i32
    return %arg0, %c0_i32 : i32, i32
  }
}

module attributes {stable_mosaic.version = 11 : i64} {
  func.func @_node_mlp_kernel_plain(%arg0: i32, %arg1: memref<16x16xf32, #tpu.memory_space<vmem>>, %arg2: memref<16x16xf32, #tpu.memory_space<vmem>>, %arg3: memref<32x32xf32, #tpu.memory_space<vmem>>, %arg4: memref<1x32xf32, #tpu.memory_space<vmem>>, %arg5: memref<32x32xf32, #tpu.memory_space<vmem>>, %arg6: memref<1x32xf32, #tpu.memory_space<vmem>>, %arg7: memref<32x32xf32, #tpu.memory_space<vmem>>, %arg8: memref<1x32xf32, #tpu.memory_space<vmem>>, %arg9: memref<1x32xf32, #tpu.memory_space<vmem>>, %arg10: memref<1x32xf32, #tpu.memory_space<vmem>>, %arg11: memref<16x32xf32, #tpu.memory_space<vmem>>) attributes {dimension_semantics = [#tpu.dimension_semantics<parallel>], iteration_bounds = array<i64: 1>, scalar_prefetch = 0 : i64, scratch_operands = 0 : i64, tpu.core_type = #tpu.core_type<tc>, window_params = [{transform_indices = @transform_0, window_bounds = array<i64: 16, 16>}, {transform_indices = @transform_1, window_bounds = array<i64: 16, 16>}, {pipeline_mode = #tpu.pipeline_mode<synchronous>, transform_indices = @transform_2, window_bounds = array<i64: 32, 32>}, {pipeline_mode = #tpu.pipeline_mode<synchronous>, transform_indices = @transform_3, window_bounds = array<i64: 1, 32>}, {pipeline_mode = #tpu.pipeline_mode<synchronous>, transform_indices = @transform_4, window_bounds = array<i64: 32, 32>}, {pipeline_mode = #tpu.pipeline_mode<synchronous>, transform_indices = @transform_5, window_bounds = array<i64: 1, 32>}, {pipeline_mode = #tpu.pipeline_mode<synchronous>, transform_indices = @transform_6, window_bounds = array<i64: 32, 32>}, {pipeline_mode = #tpu.pipeline_mode<synchronous>, transform_indices = @transform_7, window_bounds = array<i64: 1, 32>}, {pipeline_mode = #tpu.pipeline_mode<synchronous>, transform_indices = @transform_8, window_bounds = array<i64: 1, 32>}, {pipeline_mode = #tpu.pipeline_mode<synchronous>, transform_indices = @transform_9, window_bounds = array<i64: 1, 32>}, {transform_indices = @transform_10, window_bounds = array<i64: 16, 32>}]} {
    %c0 = arith.constant 0 : index
    %c0_0 = arith.constant 0 : index
    %0 = vector.load %arg1[%c0, %c0_0] : memref<16x16xf32, #tpu.memory_space<vmem>>, vector<16x16xf32>
    %c0_1 = arith.constant 0 : index
    %c0_2 = arith.constant 0 : index
    %1 = vector.load %arg2[%c0_1, %c0_2] : memref<16x16xf32, #tpu.memory_space<vmem>>, vector<16x16xf32>
    %c0_3 = arith.constant 0 : index
    %c0_4 = arith.constant 0 : index
    %2 = vector.load %arg3[%c0_3, %c0_4] : memref<32x32xf32, #tpu.memory_space<vmem>>, vector<32x32xf32>
    %3 = vector.extract_strided_slice %2 {offsets = [0, 0], sizes = [16, 32], strides = [1, 1]} : vector<32x32xf32> to vector<16x32xf32>
    %cst = arith.constant dense<0.000000e+00> : vector<16x32xf32>
    %4 = tpu.matmul %0, %3, %cst {dimension_numbers = #tpu.dot_dimension_numbers<[1], [0], [0], [1], [0, 0, 1, 1], [], []>} : vector<16x16xf32>, vector<16x32xf32>, vector<16x32xf32> -> vector<16x32xf32>
    %5 = vector.extract_strided_slice %2 {offsets = [16, 0], sizes = [16, 32], strides = [1, 1]} : vector<32x32xf32> to vector<16x32xf32>
    %cst_5 = arith.constant dense<0.000000e+00> : vector<16x32xf32>
    %6 = tpu.matmul %1, %5, %cst_5 {dimension_numbers = #tpu.dot_dimension_numbers<[1], [0], [0], [1], [0, 0, 1, 1], [], []>} : vector<16x16xf32>, vector<16x32xf32>, vector<16x32xf32> -> vector<16x32xf32>
    %7 = arith.addf %4, %6 : vector<16x32xf32>
    %c0_6 = arith.constant 0 : index
    %c0_7 = arith.constant 0 : index
    %8 = vector.load %arg4[%c0_6, %c0_7] : memref<1x32xf32, #tpu.memory_space<vmem>>, vector<1x32xf32>
    %9 = vector.broadcast %8 : vector<1x32xf32> to vector<16x32xf32>
    %10 = arith.addf %7, %9 : vector<16x32xf32>
    %11 = math.tanh %10 : vector<16x32xf32>
    %c0_8 = arith.constant 0 : index
    %c0_9 = arith.constant 0 : index
    %12 = vector.load %arg5[%c0_8, %c0_9] : memref<32x32xf32, #tpu.memory_space<vmem>>, vector<32x32xf32>
    %cst_10 = arith.constant dense<0.000000e+00> : vector<16x32xf32>
    %13 = tpu.matmul %11, %12, %cst_10 {dimension_numbers = #tpu.dot_dimension_numbers<[1], [0], [0], [1], [0, 0, 1, 1], [], []>} : vector<16x32xf32>, vector<32x32xf32>, vector<16x32xf32> -> vector<16x32xf32>
    %c0_11 = arith.constant 0 : index
    %c0_12 = arith.constant 0 : index
    %14 = vector.load %arg6[%c0_11, %c0_12] : memref<1x32xf32, #tpu.memory_space<vmem>>, vector<1x32xf32>
    %15 = vector.broadcast %14 : vector<1x32xf32> to vector<16x32xf32>
    %16 = arith.addf %13, %15 : vector<16x32xf32>
    %17 = math.tanh %16 : vector<16x32xf32>
    %c0_13 = arith.constant 0 : index
    %c0_14 = arith.constant 0 : index
    %18 = vector.load %arg7[%c0_13, %c0_14] : memref<32x32xf32, #tpu.memory_space<vmem>>, vector<32x32xf32>
    %cst_15 = arith.constant dense<0.000000e+00> : vector<16x32xf32>
    %19 = tpu.matmul %17, %18, %cst_15 {dimension_numbers = #tpu.dot_dimension_numbers<[1], [0], [0], [1], [0, 0, 1, 1], [], []>} : vector<16x32xf32>, vector<32x32xf32>, vector<16x32xf32> -> vector<16x32xf32>
    %c0_16 = arith.constant 0 : index
    %c0_17 = arith.constant 0 : index
    %20 = vector.load %arg8[%c0_16, %c0_17] : memref<1x32xf32, #tpu.memory_space<vmem>>, vector<1x32xf32>
    %21 = vector.broadcast %20 : vector<1x32xf32> to vector<16x32xf32>
    %22 = arith.addf %19, %21 : vector<16x32xf32>
    %cst_18 = arith.constant dense<0.000000e+00> : vector<16xf32>
    %23 = vector.multi_reduction <add>, %22, %cst_18 [1] : vector<16x32xf32> to vector<16xf32>
    %24 = vector.shape_cast %23 : vector<16xf32> to vector<16x1xf32>
    %cst_19 = arith.constant 3.200000e+01 : f32
    %25 = vector.broadcast %cst_19 : f32 to vector<16x1xf32>
    %26 = arith.divf %24, %25 : vector<16x1xf32>
    %27 = vector.broadcast %26 : vector<16x1xf32> to vector<16x32xf32>
    %28 = arith.subf %22, %27 : vector<16x32xf32>
    %29 = arith.mulf %28, %28 : vector<16x32xf32>
    %cst_20 = arith.constant dense<0.000000e+00> : vector<16xf32>
    %30 = vector.multi_reduction <add>, %29, %cst_20 [1] : vector<16x32xf32> to vector<16xf32>
    %31 = vector.shape_cast %30 : vector<16xf32> to vector<16x1xf32>
    %cst_21 = arith.constant 3.200000e+01 : f32
    %32 = vector.broadcast %cst_21 : f32 to vector<16x1xf32>
    %33 = arith.divf %31, %32 : vector<16x1xf32>
    %cst_22 = arith.constant 9.99999974E-6 : f32
    %34 = vector.broadcast %cst_22 : f32 to vector<16x1xf32>
    %35 = arith.addf %33, %34 : vector<16x1xf32>
    %36 = math.rsqrt %35 : vector<16x1xf32>
    %37 = vector.broadcast %36 : vector<16x1xf32> to vector<16x32xf32>
    %38 = arith.mulf %28, %37 : vector<16x32xf32>
    %c0_23 = arith.constant 0 : index
    %c0_24 = arith.constant 0 : index
    %39 = vector.load %arg9[%c0_23, %c0_24] : memref<1x32xf32, #tpu.memory_space<vmem>>, vector<1x32xf32>
    %40 = vector.broadcast %39 : vector<1x32xf32> to vector<16x32xf32>
    %41 = arith.mulf %38, %40 : vector<16x32xf32>
    %c0_25 = arith.constant 0 : index
    %c0_26 = arith.constant 0 : index
    %42 = vector.load %arg10[%c0_25, %c0_26] : memref<1x32xf32, #tpu.memory_space<vmem>>, vector<1x32xf32>
    %43 = vector.broadcast %42 : vector<1x32xf32> to vector<16x32xf32>
    %44 = arith.addf %41, %43 : vector<16x32xf32>
    %c0_27 = arith.constant 0 : index
    %c0_28 = arith.constant 0 : index
    %45 = vector.load %arg11[%c0_27, %c0_28] : memref<16x32xf32, #tpu.memory_space<vmem>>, vector<16x32xf32>
    tpu.vector_store %arg11[%c0_27, %c0_28], %44 {strides = array<i32>} : memref<16x32xf32, #tpu.memory_space<vmem>>, vector<16x32xf32>,
    return
  }
  func.func @transform_0(%arg0: i32) -> (i32, i32) {
    %c0_i32 = arith.constant 0 : i32
    %c0_i32_0 = arith.constant 0 : i32
    return %arg0, %c0_i32 : i32, i32
  }
  func.func @transform_1(%arg0: i32) -> (i32, i32) {
    %c0_i32 = arith.constant 0 : i32
    %c0_i32_0 = arith.constant 0 : i32
    return %arg0, %c0_i32 : i32, i32
  }
  func.func @transform_2(%arg0: i32) -> (i32, i32) {
    %c0_i32 = arith.constant 0 : i32
    %c0_i32_0 = arith.constant 0 : i32
    %c0_i32_1 = arith.constant 0 : i32
    return %c0_i32, %c0_i32_0 : i32, i32
  }
  func.func @transform_3(%arg0: i32) -> (i32, i32) {
    %c0_i32 = arith.constant 0 : i32
    %c0_i32_0 = arith.constant 0 : i32
    %c0_i32_1 = arith.constant 0 : i32
    return %c0_i32, %c0_i32_0 : i32, i32
  }
  func.func @transform_4(%arg0: i32) -> (i32, i32) {
    %c0_i32 = arith.constant 0 : i32
    %c0_i32_0 = arith.constant 0 : i32
    %c0_i32_1 = arith.constant 0 : i32
    return %c0_i32, %c0_i32_0 : i32, i32
  }
  func.func @transform_5(%arg0: i32) -> (i32, i32) {
    %c0_i32 = arith.constant 0 : i32
    %c0_i32_0 = arith.constant 0 : i32
    %c0_i32_1 = arith.constant 0 : i32
    return %c0_i32, %c0_i32_0 : i32, i32
  }
  func.func @transform_6(%arg0: i32) -> (i32, i32) {
    %c0_i32 = arith.constant 0 : i32
    %c0_i32_0 = arith.constant 0 : i32
    %c0_i32_1 = arith.constant 0 : i32
    return %c0_i32, %c0_i32_0 : i32, i32
  }
  func.func @transform_7(%arg0: i32) -> (i32, i32) {
    %c0_i32 = arith.constant 0 : i32
    %c0_i32_0 = arith.constant 0 : i32
    %c0_i32_1 = arith.constant 0 : i32
    return %c0_i32, %c0_i32_0 : i32, i32
  }
  func.func @transform_8(%arg0: i32) -> (i32, i32) {
    %c0_i32 = arith.constant 0 : i32
    %c0_i32_0 = arith.constant 0 : i32
    %c0_i32_1 = arith.constant 0 : i32
    return %c0_i32, %c0_i32_0 : i32, i32
  }
  func.func @transform_9(%arg0: i32) -> (i32, i32) {
    %c0_i32 = arith.constant 0 : i32
    %c0_i32_0 = arith.constant 0 : i32
    %c0_i32_1 = arith.constant 0 : i32
    return %c0_i32, %c0_i32_0 : i32, i32
  }
  func.func @transform_10(%arg0: i32) -> (i32, i32) {
    %c0_i32 = arith.constant 0 : i32
    %c0_i32_0 = arith.constant 0 : i32
    return %arg0, %c0_i32 : i32, i32
  }
}

</mosaic_0001>

<llo_original>
// kernel: node_model_forward.1
$region0: #{node_model_forward.1}
  #allocation0 [shape = 'u32[]', space=smem, size = 0x4, offset = 0x4, fixed_abs, tag = 'smem constant byte address 0x4 - core index']
  #allocation1 [shape = 'u32[72,128]{1,0:T(1,128)}', space=vmem, size = 0x9000, scoped, tag = 'internal scratch']
  %s0 = inlined_call_operand.hbm [shape: f32[16,16], index: 0, kind: input, shape index: {}]
  %s1 = inlined_call_operand.hbm [shape: f32[16,16], index: 1, kind: input, shape index: {}]
  %s2 = inlined_call_operand.hbm [shape: f32[32,32], index: 2, kind: input, shape index: {}]
  %s3 = inlined_call_operand.vmem [shape: f32[1,32], index: 3, kind: input, shape index: {}]
  %s4 = inlined_call_operand.hbm [shape: f32[32,32], index: 4, kind: input, shape index: {}]
  %s5 = inlined_call_operand.vmem [shape: f32[1,32], index: 5, kind: input, shape index: {}]
  %s6 = inlined_call_operand.hbm [shape: f32[32,32], index: 6, kind: input, shape index: {}]
  %s7 = inlined_call_operand.vmem [shape: f32[1,32], index: 7, kind: input, shape index: {}]
  %s8 = inlined_call_operand.vmem [shape: f32[1,32], index: 8, kind: input, shape index: {}]
  %s9 = inlined_call_operand.vmem [shape: f32[1,32], index: 9, kind: input, shape index: {}]
  %s10 = inlined_call_operand.hbm [shape: f32[16,32], index: 10, kind: output, shape index: {}]
  %s11 = sld [smem:[#allocation0]]
  $region70: #{node_model_forward.1} parent=0
    _
  %s13 = ssub.s32 1, %s11
  %s14 = scalar_select 0, %s13, %s11
  $region1: #{node_model_forward.1} parent=0
    #allocation2 [shape = 'u8[8192]{0}', space=vmem, size = 0x2000, scoped, tag = 'input window, operand 0, single buffered']
    #allocation3 [shape = 's32[1]{0}', space=sflag, size = 0x4, scoped, tag = 'scoped memory for node_model_forward.1']
    #allocation4 [shape = 's32[1]{0}', space=sflag, size = 0x4, scoped, tag = 'scoped memory for node_model_forward.1']
    #allocation5 [shape = 'u8[8192]{0}', space=vmem, size = 0x2000, scoped, tag = 'input window, operand 1, single buffered']
    #allocation6 [shape = 's32[1]{0}', space=sflag, size = 0x4, scoped, tag = 'scoped memory for node_model_forward.1']
    #allocation7 [shape = 'u8[16384]{0}', space=vmem, size = 0x4000, scoped, tag = 'input window, operand 2, single buffered']
    #allocation8 [shape = 'u8[16384]{0}', space=vmem, size = 0x4000, scoped, tag = 'input window, operand 4, single buffered']
    #allocation9 [shape = 's32[1]{0}', space=sflag, size = 0x4, scoped, tag = 'scoped memory for node_model_forward.1']
    #allocation10 [shape = 'u8[16384]{0}', space=vmem, size = 0x4000, scoped, tag = 'input window, operand 6, single buffered']
    #allocation11 [shape = 'u8[8192]{0}', space=vmem, size = 0x2000, scoped, tag = 'output window, operand 0, single buffered']
    %15 = vsyncpa [#allocation3], 0
    %16 = vsyncpa [#allocation6], 0
    %17 = vsyncpa [#allocation9], 0
    %18 = vsyncpa [#allocation4], 0
    // Predicated region
    $region2: #{node_model_forward.1} parent=1 // pred_check
      _
    $region3: #{node_model_forward.1} parent=1 // pred_check_branch
      %20 = sbr.rel (0) target = $region5
    $region4: #{node_model_forward.1} parent=1 // pred_region
      %22 = vsyncadd [#allocation3], 0
      %s23 = sshll.u32 %s0, 4
      %s24 = int_to_ptr.hbm [resolvable:$true] %s23
      %s25 = sshll.u32 [#allocation2], 4
      %s26 = int_to_ptr.vmem [resolvable:$true] %s25
      %31 = dma.hbm_to_vmem [thread:$0]  %s24, 256, %s26, [#allocation3], 128, 128, 8
    $region5: #{node_model_forward.1} parent=1 // pred_fallthru
      _
    // Predicated region
    $region6: #{node_model_forward.1} parent=1 // pred_check
      _
    $region7: #{node_model_forward.1} parent=1 // pred_check_branch
      %33 = sbr.rel (0) target = $region9
    $region8: #{node_model_forward.1} parent=1 // pred_region
      %35 = vsyncadd [#allocation6], 0
      %s36 = sshll.u32 %s1, 4
      %s37 = int_to_ptr.hbm [resolvable:$true] %s36
      %s38 = sshll.u32 [#allocation5], 4
      %s39 = int_to_ptr.vmem [resolvable:$true] %s38
      %44 = dma.hbm_to_vmem [thread:$0]  %s37, 256, %s39, [#allocation6], 128, 128, 8
    $region9: #{node_model_forward.1} parent=1 // pred_fallthru
      _
    // Predicated region
    $region10: #{node_model_forward.1} parent=1 // pred_check
      _
    $region11: #{node_model_forward.1} parent=1 // pred_check_branch
      %46 = sbr.rel (0) target = $region13
    $region12: #{node_model_forward.1} parent=1 // pred_region
      %48 = vsyncadd [#allocation6], 0
      %s49 = sshll.u32 %s2, 4
      %s50 = int_to_ptr.hbm [resolvable:$true] %s49
      %s51 = sshll.u32 [#allocation7], 4
      %s52 = int_to_ptr.vmem [resolvable:$true] %s51
      %57 = dma.hbm_to_vmem [thread:$0]  %s50, 512, %s52, [#allocation6], 128, 128, 8
    $region13: #{node_model_forward.1} parent=1 // pred_fallthru
      _
    // Predicated region
    $region14: #{node_model_forward.1} parent=1 // pred_check
      _
    $region15: #{node_model_forward.1} parent=1 // pred_check_branch
      %59 = sbr.rel (0) target = $region17
    $region16: #{node_model_forward.1} parent=1 // pred_region
      _
    $region17: #{node_model_forward.1} parent=1 // pred_fallthru
      _
    // Predicated region
    $region18: #{node_model_forward.1} parent=1 // pred_check
      _
    $region19: #{node_model_forward.1} parent=1 // pred_check_branch
      %61 = sbr.rel (0) target = $region21
    $region20: #{node_model_forward.1} parent=1 // pred_region
      %63 = vsyncadd [#allocation9], 0
      %s64 = sshll.u32 %s4, 4
      %s65 = int_to_ptr.hbm [resolvable:$true] %s64
      %s66 = sshll.u32 [#allocation8], 4
      %s67 = int_to_ptr.vmem [resolvable:$true] %s66
      %72 = dma.hbm_to_vmem [thread:$0]  %s65, 512, %s67, [#allocation9], 128, 128, 8
    $region21: #{node_model_forward.1} parent=1 // pred_fallthru
      _
    // Predicated region
    $region22: #{node_model_forward.1} parent=1 // pred_check
      _
    $region23: #{node_model_forward.1} parent=1 // pred_check_branch
      %74 = sbr.rel (0) target = $region25
    $region24: #{node_model_forward.1} parent=1 // pred_region
      _
    $region25: #{node_model_forward.1} parent=1 // pred_fallthru
      _
    // Predicated region
    $region26: #{node_model_forward.1} parent=1 // pred_check
      _
    $region27: #{node_model_forward.1} parent=1 // pred_check_branch
      %76 = sbr.rel (0) target = $region29
    $region28: #{node_model_forward.1} parent=1 // pred_region
      %78 = vsyncadd [#allocation9], 0
      %s79 = sshll.u32 %s6, 4
      %s80 = int_to_ptr.hbm [resolvable:$true] %s79
      %s81 = sshll.u32 [#allocation10], 4
      %s82 = int_to_ptr.vmem [resolvable:$true] %s81
      %87 = dma.hbm_to_vmem [thread:$0]  %s80, 512, %s82, [#allocation9], 128, 128, 8
    $region29: #{node_model_forward.1} parent=1 // pred_fallthru
      _
    // Predicated region
    $region30: #{node_model_forward.1} parent=1 // pred_check
      _
    $region31: #{node_model_forward.1} parent=1 // pred_check_branch
      %89 = sbr.rel (0) target = $region33
    $region32: #{node_model_forward.1} parent=1 // pred_region
      _
    $region33: #{node_model_forward.1} parent=1 // pred_fallthru
      _
    // Predicated region
    $region34: #{node_model_forward.1} parent=1 // pred_check
      _
    $region35: #{node_model_forward.1} parent=1 // pred_check_branch
      %91 = sbr.rel (0) target = $region37
    $region36: #{node_model_forward.1} parent=1 // pred_region
      _
    $region37: #{node_model_forward.1} parent=1 // pred_fallthru
      _
    // Predicated region
    $region38: #{node_model_forward.1} parent=1 // pred_check
      _
    $region39: #{node_model_forward.1} parent=1 // pred_check_branch
      %93 = sbr.rel (0) target = $region41
    $region40: #{node_model_forward.1} parent=1 // pred_region
      _
    $region41: #{node_model_forward.1} parent=1 // pred_fallthru
      _
    // Predicated region
    $region42: #{node_model_forward.1} parent=1 // pred_check
      _
    $region43: #{node_model_forward.1} parent=1 // pred_check_branch
      %95 = sbr.rel (0) target = $region45
    $region44: #{node_model_forward.1} parent=1 // pred_region
      %97 = dma.done [#allocation3], 256
    $region45: #{node_model_forward.1} parent=1 // pred_fallthru
      _
    // Predicated region
    $region46: #{node_model_forward.1} parent=1 // pred_check
      _
    $region47: #{node_model_forward.1} parent=1 // pred_check_branch
      %99 = sbr.rel (0) target = $region49
    $region48: #{node_model_forward.1} parent=1 // pred_region
      %101 = dma.done [#allocation6], 256
    $region49: #{node_model_forward.1} parent=1 // pred_fallthru
      _
    // Predicated region
    $region50: #{node_model_forward.1} parent=1 // pred_check
      _
    $region51: #{node_model_forward.1} parent=1 // pred_check_branch
      %103 = sbr.rel (0) target = $region53
    $region52: #{node_model_forward.1} parent=1 // pred_region
      %105 = dma.done [#allocation6], 512
    $region53: #{node_model_forward.1} parent=1 // pred_fallthru
      _
    // Predicated region
    $region54: #{node_model_forward.1} parent=1 // pred_check
      _
    $region55: #{node_model_forward.1} parent=1 // pred_check_branch
      %107 = sbr.rel (0) target = $region57
    $region56: #{node_model_forward.1} parent=1 // pred_region
      %109 = dma.done [#allocation9], 512
    $region57: #{node_model_forward.1} parent=1 // pred_fallthru
      _
    // Predicated region
    $region58: #{node_model_forward.1} parent=1 // pred_check
      _
    $region59: #{node_model_forward.1} parent=1 // pred_check_branch
      %111 = sbr.rel (0) target = $region61
    $region60: #{node_model_forward.1} parent=1 // pred_region
      %113 = dma.done [#allocation9], 512
    $region61: #{node_model_forward.1} parent=1 // pred_fallthru
      _
    %v114 = vld [vmem:[#allocation2] sm:$0xff]
    %v115 = vld [vmem:[#allocation2 + $0x8] sm:$0xff]
    %v116 = vld [vmem:[#allocation5] sm:$0xff]
    %v117 = vld [vmem:[#allocation5 + $0x8] sm:$0xff]
    %v118 = vld [vmem:[#allocation7] sm:$0xff]
    %v119 = vld [vmem:[#allocation7 + $0x8] sm:$0xff]
    %v120 = vld [vmem:[#allocation7 + $0x10] sm:$0xff]
    %v121 = vld [vmem:[#allocation7 + $0x18] sm:$0xff]
    %vm122 = vcmask 130048
    %v124 = vsel %vm122, %v116, 0
    %v127 = vsel %vm122, %v117, 0
    %129 = vmatpush.msra.mxu0 0.0
    %130 = vmatpush.msra.mxu0 0.0
    %131 = vmatpush.msra.mxu0 0.0
    %132 = vmatpush.msra.mxu0 0.0
    %133 = vmatpush.msra.mxu0 0.0
    %134 = vmatpush.msra.mxu0 0.0
    %135 = vmatpush.msra.mxu0 0.0
    %136 = vmatpush.msra.mxu0 0.0
    %137 = vmatpush.msra.mxu0 0.0
    %138 = vmatpush.msra.mxu0 0.0
    %139 = vmatpush.msra.mxu0 0.0
    %140 = vmatpush.msra.mxu0 0.0
    %141 = vmatpush.msra.mxu0 0.0
    %142 = vmatpush.msra.mxu0 0.0
    %143 = vmatpush.msra.mxu0 %v121
    %144 = vmatpush.msra.mxu0 %v120
    %145 = vmatmul.f32.gmra.mxu0 %v124
    %v146 = vpop.f32.mrf.mxu0
    %v147 = vadd.f32 0.0, %v146
    %148 = vmatmul.f32.gmra.mxu0 %v127
    %v149 = vpop.f32.mrf.mxu0
    %v150 = vadd.f32 0.0, %v149
    %151 = vdwg.mxu0
    %v153 = vsel %vm122, %v114, 0
    %v156 = vsel %vm122, %v115, 0
    %158 = vmatpush.msra.mxu0 0.0
    %159 = vmatpush.msra.mxu0 0.0
    %160 = vmatpush.msra.mxu0 0.0
    %161 = vmatpush.msra.mxu0 0.0
    %162 = vmatpush.msra.mxu0 0.0
    %163 = vmatpush.msra.mxu0 0.0
    %164 = vmatpush.msra.mxu0 0.0
    %165 = vmatpush.msra.mxu0 0.0
    %166 = vmatpush.msra.mxu0 0.0
    %167 = vmatpush.msra.mxu0 0.0
    %168 = vmatpush.msra.mxu0 0.0
    %169 = vmatpush.msra.mxu0 0.0
    %170 = vmatpush.msra.mxu0 0.0
    %171 = vmatpush.msra.mxu0 0.0
    %172 = vmatpush.msra.mxu0 %v119
    %173 = vmatpush.msra.mxu0 %v118
    %174 = vmatmul.f32.gmra.mxu0 %v153
    %v175 = vpop.f32.mrf.mxu0
    %v176 = vadd.f32 %v147, %v175
    %177 = vmatmul.f32.gmra.mxu0 %v156
    %v178 = vpop.f32.mrf.mxu0
    %v179 = vadd.f32 %v150, %v178
    %180 = vdwg.mxu0
    %v181 = vld [vmem:[%s3] sm:$0x1]
    %v183 = vperm.slane %v181, 0
    %v185 = vadd.f32 %v176, %v183
    %v186 = vadd.f32 %v179, %v183
    %v187 = vtanh.pop %v185
    %v188 = vtanh.pop %v186
    %v189 = vld [vmem:[#allocation8] sm:$0xff]
    %v190 = vld [vmem:[#allocation8 + $0x8] sm:$0xff]
    %v191 = vld [vmem:[#allocation8 + $0x10] sm:$0xff]
    %v192 = vld [vmem:[#allocation8 + $0x18] sm:$0xff]
    %v193 = vld [vmem:[%s5] sm:$0x1]
    %v195 = vperm.slane %v193, 0
    %vm197 = vcmask 261120
    %v199 = vsel %vm197, %v187, 0
    %v202 = vsel %vm197, %v188, 0
    %204 = vmatpush.msra.mxu0 0.0
    %205 = vmatpush.msra.mxu0 0.0
    %206 = vmatpush.msra.mxu0 0.0
    %207 = vmatpush.msra.mxu0 0.0
    %208 = vmatpush.msra.mxu0 0.0
    %209 = vmatpush.msra.mxu0 0.0
    %210 = vmatpush.msra.mxu0 0.0
    %211 = vmatpush.msra.mxu0 0.0
    %212 = vmatpush.msra.mxu0 0.0
    %213 = vmatpush.msra.mxu0 0.0
    %214 = vmatpush.msra.mxu0 0.0
    %215 = vmatpush.msra.mxu0 0.0
    %216 = vmatpush.msra.mxu0 %v192
    %217 = vmatpush.msra.mxu0 %v191
    %218 = vmatpush.msra.mxu0 %v190
    %219 = vmatpush.msra.mxu0 %v189
    %220 = vmatmul.f32.gmra.mxu0 %v199
    %v221 = vpop.f32.mrf.mxu0
    %v222 = vadd.f32 %v195, %v221
    %223 = vmatmul.f32.gmra.mxu0 %v202
    %v224 = vpop.f32.mrf.mxu0
    %v225 = vadd.f32 %v195, %v224
    %226 = vdwg.mxu0
    %v227 = vtanh.pop %v222
    %v228 = vtanh.pop %v225
    %v229 = vld [vmem:[#allocation10] sm:$0xff]
    %v230 = vld [vmem:[#allocation10 + $0x8] sm:$0xff]
    %v231 = vld [vmem:[#allocation10 + $0x10] sm:$0xff]
    %v232 = vld [vmem:[#allocation10 + $0x18] sm:$0xff]
    %v233 = vld [vmem:[%s7] sm:$0x1]
    %v235 = vperm.slane %v233, 0
    %v238 = vsel %vm197, %v227, 0
    %v241 = vsel %vm197, %v228, 0
    %243 = vmatpush.msra.mxu0 0.0
    %244 = vmatpush.msra.mxu0 0.0
    %245 = vmatpush.msra.mxu0 0.0
    %246 = vmatpush.msra.mxu0 0.0
    %247 = vmatpush.msra.mxu0 0.0
    %248 = vmatpush.msra.mxu0 0.0
    %249 = vmatpush.msra.mxu0 0.0
    %250 = vmatpush.msra.mxu0 0.0
    %251 = vmatpush.msra.mxu0 0.0
    %252 = vmatpush.msra.mxu0 0.0
    %253 = vmatpush.msra.mxu0 0.0
    %254 = vmatpush.msra.mxu0 0.0
    %255 = vmatpush.msra.mxu0 %v232
    %256 = vmatpush.msra.mxu0 %v231
    %257 = vmatpush.msra.mxu0 %v230
    %258 = vmatpush.msra.mxu0 %v229
    %259 = vmatmul.f32.gmra.mxu0 %v238
    %v260 = vpop.f32.mrf.mxu0
    %v261 = vadd.f32 %v235, %v260
    %262 = vmatmul.f32.gmra.mxu0 %v241
    %v263 = vpop.f32.mrf.mxu0
    %v264 = vadd.f32 %v235, %v263
    %265 = vdwg.mxu0
    %v266 = vsel %vm197, %v261, 0.0
    %267 = vadd.xlane.f32.xlu0 %v266
    %v268 = vpop.xlane.xlu0 %267
    %v269 = vsel %vm197, %v264, 0.0
    %270 = vadd.xlane.f32.xlu0 %v269
    %v271 = vpop.xlane.xlu0 %270
    %v272 = vrcp.pop 32.0
    %v273 = vmul.f32 32.0, %v272
    %v274 = vsub.f32 1.0, %v273
    %v275 = vmul.f32 %v272, %v274
    %v276 = vadd.f32 %v272, %v275
    %vm277 = vweird.f32 %v272
    %v278 = vsel %vm277, %v272, %v276
    %v279 = vmul.f32 %v268, %v278
    %v280 = vmul.f32 %v271, %v278
    %v281 = vsub.f32 %v261, %v279
    %v282 = vsub.f32 %v264, %v280
    %v283 = vmul.f32 %v281, %v281
    %v284 = vmul.f32 %v282, %v282
    %v285 = vsel %vm197, %v283, 0.0
    %286 = vadd.xlane.f32.xlu0 %v285
    %v287 = vpop.xlane.xlu0 %286
    %v288 = vsel %vm197, %v284, 0.0
    %289 = vadd.xlane.f32.xlu0 %v288
    %v290 = vpop.xlane.xlu0 %289
    %v291 = vmul.f32 %v287, %v278
    %v292 = vmul.f32 %v290, %v278
    %v293 = vadd.f32 %v291, 1e-05
    %v294 = vadd.f32 %v292, 1e-05
    %v295 = vrsqrt.pop %v293
    %v296 = vmul.f32 %v295, %v293
    %v297 = vmul.f32 %v296, %v295
    %v298 = vmul.f32 0.5, %v297
    %v299 = vsub.f32 1.5, %v298
    %v300 = vmul.f32 %v295, %v299
    %vm301 = vweird.f32 %v293
    %vm302 = vweird.f32 %v295
    %vm303 = vmor %vm301, %vm302
    %v304 = vsel %vm303, %v295, %v300
    %v305 = vrsqrt.pop %v294
    %v306 = vmul.f32 %v305, %v294
    %v307 = vmul.f32 %v306, %v305
    %v308 = vmul.f32 0.5, %v307
    %v309 = vsub.f32 1.5, %v308
    %v310 = vmul.f32 %v305, %v309
    %vm311 = vweird.f32 %v294
    %vm312 = vweird.f32 %v305
    %vm313 = vmor %vm311, %vm312
    %v314 = vsel %vm313, %v305, %v310
    %v315 = vmul.f32 %v281, %v304
    %v316 = vmul.f32 %v282, %v314
    %v317 = vld [vmem:[%s8] sm:$0x1]
    %v319 = vperm.slane %v317, 0
    %v321 = vmul.f32 %v315, %v319
    %v322 = vmul.f32 %v316, %v319
    %v323 = vld [vmem:[%s9] sm:$0x1]
    %v325 = vperm.slane %v323, 0
    %v327 = vadd.f32 %v321, %v325
    %v328 = vadd.f32 %v322, %v325
    %329 = vst.msk [vmem:[#allocation11] sm:$0xff] %vm197, %v327
    %330 = vst.msk [vmem:[#allocation11 + $0x8] sm:$0xff] %vm197, %v328
    // Predicated region
    $region62: #{node_model_forward.1} parent=1 // pred_check
      _
    $region63: #{node_model_forward.1} parent=1 // pred_check_branch
      %332 = sbr.rel (0) target = $region65
    $region64: #{node_model_forward.1} parent=1 // pred_region
      %334 = vsyncadd [#allocation4], 0
      %s335 = sshll.u32 [#allocation11], 4
      %s336 = int_to_ptr.vmem [resolvable:$true] %s335
      %s337 = sshll.u32 %s10, 4
      %s338 = int_to_ptr.hbm [resolvable:$true] %s337
      %343 = dma.vmem_to_hbm [thread:$0]  %s336, 256, %s338, [#allocation4], 128, 128, 8
    $region65: #{node_model_forward.1} parent=1 // pred_fallthru
      _
    // Predicated region
    $region66: #{node_model_forward.1} parent=1 // pred_check
      _
    $region67: #{node_model_forward.1} parent=1 // pred_check_branch
      %345 = sbr.rel (0) target = $region69
    $region68: #{node_model_forward.1} parent=1 // pred_region
      %347 = dma.done [#allocation4], 256
    $region69: #{node_model_forward.1} parent=1 // pred_fallthru
      _
    %348 = vsyncpa [#allocation3], 1
    %349 = vsyncpa [#allocation6], 1
    %350 = vsyncpa [#allocation9], 1
    %351 = vsyncpa [#allocation4], 1

</llo_original>
